<compile_context>
chip_gen: v7x
topology: tpu7x:2x2x1
jax: 0.10.0
libtpu: 0.0.40
codegen_flags: <defaults>
</compile_context>

<pallas_src>
import jax
import jax.numpy as jnp
from jax import lax
from jax.experimental import pallas as pl
from jax.experimental.pallas import tpu as pltpu


# -----------------------------------------------------------------------------
# Path A: embedding table resident in VMEM (small / medium V*D).
# -----------------------------------------------------------------------------
def ffnn_resident_kernel(idx_ref,             # SMEM [B*S] int32 (scalar prefetch)
                         emb_ref,             # VMEM [V, D]    whole table
                         w1_ref,              # VMEM [S*D, H]  tiled w1 * (1/S)
                         b1_ref,              # VMEM [1, H]
                         w2_ref,              # VMEM [1, H]
                         b2_ref,              # VMEM [1, 1]
                         out_ref,             # VMEM [1, TB]   lane-dense block
                         slab_ref):           # VMEM [TB, S*D] scratch
    tb, sd = slab_ref.shape
    _, d = emb_ref.shape
    seq = sd // d
    base = pl.program_id(0) * tb * seq

    def gather_bag(r):
        # One bag -> one lane-dense slab row [1, S*D].
        for s in range(seq):                                   # static (seq small)
            row = idx_ref[base + r * seq + s]
            slab_ref[pl.ds(r, 1), pl.ds(s * d, d)] = emb_ref[pl.ds(row, 1), :]

    if tb <= 32:
        for r in range(tb):                                    # full static unroll
            gather_bag(r)
    else:
        @pl.loop(0, tb)                                        # bound code size
        def _(r):
            gather_bag(r)

    # EmbeddingBag(mean) + layer1 fused into one MXU matmul (w1 pre-scaled by 1/S).
    h = jnp.dot(slab_ref[...], w1_ref[...],
                preferred_element_type=jnp.float32) + b1_ref[...]       # [TB, H]
    h = jnp.maximum(h, 0.0)                                             # ReLU

    # layer2 (num_classes == 1): [1,H] x [TB,H]^T -> lane-dense [1, TB].
    logits = lax.dot_general(w2_ref[...], h,
                             dimension_numbers=(((1,), (1,)), ((), ())),
                             preferred_element_type=jnp.float32)
    out_ref[...] = logits + b2_ref[...]


# -----------------------------------------------------------------------------
# Path B: embedding table resident in HBM, per-row DMA gather (large V*D).
# -----------------------------------------------------------------------------
def ffnn_hbm_gather_kernel(idx_ref,           # SMEM [B*S] int32
                           emb_hbm,           # HBM  [V, D] (memory_space=ANY)
                           w1_ref,            # VMEM [D, H]
                           b1_ref,            # VMEM [1, H]
                           w2_ref,            # VMEM [1, H]
                           b2_ref,            # VMEM [1, 1]
                           out_ref,           # VMEM [1, TB]
                           gbuf,              # VMEM [S, TB, D] gathered rows
                           sem):              # DMA sems [TB, S]
    seq, tb, _ = gbuf.shape
    base = pl.program_id(0) * tb * seq

    def row_copy(r, s):
        row = idx_ref[base + r * seq + s]
        return pltpu.make_async_copy(
            emb_hbm.at[pl.ds(row, 1), :],      # [1, D] table row
            gbuf.at[s, pl.ds(r, 1), :],        # [1, D] slot
            sem.at[r, s])

    # Static unroll so the misc slot can issue descriptors back-to-back.
    for r in range(tb):
        for s in range(seq):
            row_copy(r, s).start()
    for r in range(tb):
        for s in range(seq):
            row_copy(r, s).wait()              # identical descriptor as .start()

    # TODO(synk): cross-block double-buffered prefetch of this gather and a
    # lane-dense [TB, S*D] slab are follow-ups for the large-table path.
    acc = gbuf[0]
    for s in range(1, seq):                    # EmbeddingBag(mean)
        acc = acc + gbuf[s]
    pooled = acc * (1.0 / seq)                                          # [TB, D]

    h = jnp.dot(pooled, w1_ref[...],
                preferred_element_type=jnp.float32) + b1_ref[...]
    h = jnp.maximum(h, 0.0)
    logits = lax.dot_general(w2_ref[...], h,
                             dimension_numbers=(((1,), (1,)), ((), ())),
                             preferred_element_type=jnp.float32)
    out_ref[...] = logits + b2_ref[...]


# -----------------------------------------------------------------------------
# Wrapper
# -----------------------------------------------------------------------------
# Conservative cross-generation budget for keeping the table VMEM-resident
# (table blocks are double-buffered by the pipeline; v7x has 64 MiB VMEM / TC).
_TABLE_VMEM_BUDGET_BYTES = 8 * 1024 * 1024


def _pick_block_b(B):
    # Multiple grid steps only once B is large enough for them to pay off;
    # block_b must be a multiple of 128 whenever it does not cover the whole
    # batch (lane-dense (1, block_b) output blocks).
    if B >= 256 and B % 128 == 0:
        return 128
    return B


def _round_up(n, m):
    return ((n + m - 1) // m) * m


def first_neural_network(idx, emb, w1, b1, w2, b2, *, block_b=None):
    """EmbeddingBag(mean) -> Linear -> ReLU -> Linear -> squeeze."""
    B, S = idx.shape
    V, D = emb.shape
    H = w1.shape[1]
    C = w2.shape[1]
    # TODO(synk): kernel implements the num_classes==1 head (implied by the
    # module's .squeeze()); a C>1 head would use an MXU matmul with N padded to 128.
    assert C == 1

    if block_b is None:
        block_b = _pick_block_b(B)
    assert B % block_b == 0
    nb = B // block_b

    idx_flat = idx.reshape(B * S).astype(jnp.int32)      # 1-D SMEM, no 2-D padding
    b1_k = b1.reshape(1, H)                              # [1, H]
    w2_k = w2.T.reshape(1, H)                            # [1, H]  (C == 1)
    b2_k = b2.reshape(1, 1)                              # [1, 1]

    f32 = 4
    table_bytes = V * D * f32
    small_table = table_bytes <= _TABLE_VMEM_BUDGET_BYTES

    if small_table:
        # ---- Path A: VMEM-resident table, pooling fused into layer1 ---------
        w1f = jnp.tile(w1 * (1.0 / S), (S, 1))           # [S*D, H], scaled by 1/S
        slab_bytes = _round_up(block_b, 8) * _round_up(S * D, 128) * f32
        w1f_bytes = _round_up(S * D, 8) * _round_up(H, 128) * f32
        need = 2 * (table_bytes + w1f_bytes) + slab_bytes + (1 << 20)
        vmem_limit = int(min(max(2 * need, 16 << 20), 48 << 20))

        out = pl.pallas_call(
            ffnn_resident_kernel,
            out_shape=jax.ShapeDtypeStruct((1, B), jnp.float32),
            grid_spec=pltpu.PrefetchScalarGridSpec(
                num_scalar_prefetch=1,                               # idx -> SMEM
                grid=(nb,),
                in_specs=[
                    pl.BlockSpec((V, D), lambda b, idx_sm: (0, 0)),      # table
                    pl.BlockSpec((S * D, H), lambda b, idx_sm: (0, 0)),  # fused w1
                    pl.BlockSpec((1, H), lambda b, idx_sm: (0, 0)),      # b1
                    pl.BlockSpec((1, H), lambda b, idx_sm: (0, 0)),      # w2 row
                    pl.BlockSpec((1, 1), lambda b, idx_sm: (0, 0)),      # b2
                ],
                out_specs=pl.BlockSpec((1, block_b), lambda b, idx_sm: (0, b)),
                scratch_shapes=[pltpu.VMEM((block_b, S * D), jnp.float32)],
            ),
            compiler_params=pltpu.CompilerParams(
                dimension_semantics=("parallel",),
                vmem_limit_bytes=vmem_limit,
            ),
        )(idx_flat, emb, w1f, b1_k, w2_k, b2_k)
    else:
        # ---- Path B: HBM-resident table, per-row DMA gather ------------------
        gbuf_bytes = S * _round_up(block_b, 8) * _round_up(D, 128) * f32
        w1_bytes = _round_up(D, 8) * _round_up(H, 128) * f32
        need = 2 * w1_bytes + gbuf_bytes + (1 << 20)
        vmem_limit = int(min(max(2 * need, 16 << 20), 48 << 20))

        out = pl.pallas_call(
            ffnn_hbm_gather_kernel,
            out_shape=jax.ShapeDtypeStruct((1, B), jnp.float32),
            grid_spec=pltpu.PrefetchScalarGridSpec(
                num_scalar_prefetch=1,
                grid=(nb,),
                in_specs=[
                    pl.BlockSpec(memory_space=pl.ANY),                   # table, HBM
                    pl.BlockSpec((D, H), lambda b, idx_sm: (0, 0)),
                    pl.BlockSpec((1, H), lambda b, idx_sm: (0, 0)),
                    pl.BlockSpec((1, H), lambda b, idx_sm: (0, 0)),
                    pl.BlockSpec((1, 1), lambda b, idx_sm: (0, 0)),
                ],
                out_specs=pl.BlockSpec((1, block_b), lambda b, idx_sm: (0, b)),
                scratch_shapes=[
                    pltpu.VMEM((S, block_b, D), jnp.float32),
                    pltpu.SemaphoreType.DMA((block_b, S)),
                ],
            ),
            compiler_params=pltpu.CompilerParams(
                dimension_semantics=("parallel",),
                vmem_limit_bytes=vmem_limit,
            ),
        )(idx_flat, emb, w1, b1_k, w2_k, b2_k)

    return jnp.squeeze(out)   # (1, B) -> (B,), matches output_layer2.squeeze()


if __name__ == "__main__":
    # Small shapes consistent with the module:
    #   vocab V=32, embedding dim D = input_size = 16, hidden H = 32,
    #   num_classes C = 1 (binary logit, hence .squeeze()), batch B = 4, bag S = 8.
    B, S, V, D, H, C = 4, 8, 32, 16, 32, 1

    key = jax.random.PRNGKey(0)
    k_idx, k_emb, k_w1, k_b1, k_w2, k_b2 = jax.random.split(key, 6)

    idx = jax.random.randint(k_idx, (B, S), 0, V, dtype=jnp.int32)
    emb = jax.random.normal(k_emb, (V, D), dtype=jnp.float32)
    w1 = jax.random.normal(k_w1, (D, H), dtype=jnp.float32) * 0.1
    b1 = jax.random.normal(k_b1, (H,), dtype=jnp.float32) * 0.1
    w2 = jax.random.normal(k_w2, (H, C), dtype=jnp.float32) * 0.1
    b2 = jax.random.normal(k_b2, (C,), dtype=jnp.float32) * 0.1

    out = jax.block_until_ready(first_neural_network(idx, emb, w1, b1, w2, b2))

    # Pure-JAX reference of the PyTorch forward pass.
    emb_mean = emb[idx].mean(axis=1)                        # EmbeddingBag(mean)
    ref = jnp.maximum(emb_mean @ w1 + b1, 0.0) @ w2 + b2    # Linear->ReLU->Linear
    ref = jnp.squeeze(ref)
    assert out.shape == ref.shape
    assert jnp.allclose(out, ref, atol=1e-5, rtol=1e-5)

    print("KERNEL_OK")
</pallas_src>

<mosaic_0001>
module attributes {stable_mosaic.version = 11 : i64} {
  func.func @ffnn_resident_kernel(%arg0: i32, %arg1: memref<32xi32, #tpu.memory_space<smem>>, %arg2: memref<32x16xf32, #tpu.memory_space<vmem>>, %arg3: memref<128x32xf32, #tpu.memory_space<vmem>>, %arg4: memref<1x32xf32, #tpu.memory_space<vmem>>, %arg5: memref<1x32xf32, #tpu.memory_space<vmem>>, %arg6: memref<1x1xf32, #tpu.memory_space<vmem>>, %arg7: memref<1x4xf32, #tpu.memory_space<vmem>>, %arg8: memref<4x128xf32, #tpu.memory_space<vmem>>) attributes {dimension_semantics = [#tpu.dimension_semantics<parallel>], iteration_bounds = array<i64: 1>, scalar_prefetch = 1 : i64, scratch_operands = 1 : i64, tpu.core_type = #tpu.core_type<tc>, window_params = [{pipeline_mode = #tpu.pipeline_mode<synchronous>, transform_indices = @transform_0, window_bounds = array<i64: 32, 16>}, {pipeline_mode = #tpu.pipeline_mode<synchronous>, transform_indices = @transform_1, window_bounds = array<i64: 128, 32>}, {pipeline_mode = #tpu.pipeline_mode<synchronous>, transform_indices = @transform_2, window_bounds = array<i64: 1, 32>}, {pipeline_mode = #tpu.pipeline_mode<synchronous>, transform_indices = @transform_3, window_bounds = array<i64: 1, 32>}, {pipeline_mode = #tpu.pipeline_mode<synchronous>, transform_indices = @transform_4, window_bounds = array<i64: 1, 1>}, {transform_indices = @transform_5, window_bounds = array<i64: 1, 4>}]} {
    %c4_i32 = arith.constant 4 : i32
    %0 = arith.muli %arg0, %c4_i32 : i32
    %c8_i32 = arith.constant 8 : i32
    %1 = arith.muli %0, %c8_i32 : i32
    %c0_i32 = arith.constant 0 : i32
    %2 = arith.addi %1, %c0_i32 : i32
    %c0_i32_0 = arith.constant 0 : i32
    %3 = arith.addi %2, %c0_i32_0 : i32
    %4 = arith.index_cast %3 : i32 to index
    %5 = memref.load %arg1[%4] : memref<32xi32, #tpu.memory_space<smem>>
    %6 = arith.index_cast %5 : i32 to index
    %c0 = arith.constant 0 : index
    %7 = vector.load %arg2[%6, %c0] : memref<32x16xf32, #tpu.memory_space<vmem>>, vector<1x16xf32>
    %c0_1 = arith.constant 0 : index
    %c0_2 = arith.constant 0 : index
    %8 = vector.load %arg8[%c0_1, %c0_2] : memref<4x128xf32, #tpu.memory_space<vmem>>, vector<1x16xf32>
    tpu.vector_store %arg8[%c0_1, %c0_2], %7 {strides = array<i32>} : memref<4x128xf32, #tpu.memory_space<vmem>>, vector<1x16xf32>,
    %c0_i32_3 = arith.constant 0 : i32
    %9 = arith.addi %1, %c0_i32_3 : i32
    %c1_i32 = arith.constant 1 : i32
    %10 = arith.addi %9, %c1_i32 : i32
    %11 = arith.index_cast %10 : i32 to index
    %12 = memref.load %arg1[%11] : memref<32xi32, #tpu.memory_space<smem>>
    %13 = arith.index_cast %12 : i32 to index
    %c0_4 = arith.constant 0 : index
    %14 = vector.load %arg2[%13, %c0_4] : memref<32x16xf32, #tpu.memory_space<vmem>>, vector<1x16xf32>
    %c0_5 = arith.constant 0 : index
    %c16 = arith.constant 16 : index
    %15 = vector.load %arg8[%c0_5, %c16] : memref<4x128xf32, #tpu.memory_space<vmem>>, vector<1x16xf32>
    tpu.vector_store %arg8[%c0_5, %c16], %14 {strides = array<i32>} : memref<4x128xf32, #tpu.memory_space<vmem>>, vector<1x16xf32>,
    %c0_i32_6 = arith.constant 0 : i32
    %16 = arith.addi %1, %c0_i32_6 : i32
    %c2_i32 = arith.constant 2 : i32
    %17 = arith.addi %16, %c2_i32 : i32
    %18 = arith.index_cast %17 : i32 to index
    %19 = memref.load %arg1[%18] : memref<32xi32, #tpu.memory_space<smem>>
    %20 = arith.index_cast %19 : i32 to index
    %c0_7 = arith.constant 0 : index
    %21 = vector.load %arg2[%20, %c0_7] : memref<32x16xf32, #tpu.memory_space<vmem>>, vector<1x16xf32>
    %c0_8 = arith.constant 0 : index
    %c32 = arith.constant 32 : index
    %22 = vector.load %arg8[%c0_8, %c32] : memref<4x128xf32, #tpu.memory_space<vmem>>, vector<1x16xf32>
    tpu.vector_store %arg8[%c0_8, %c32], %21 {strides = array<i32>} : memref<4x128xf32, #tpu.memory_space<vmem>>, vector<1x16xf32>,
    %c0_i32_9 = arith.constant 0 : i32
    %23 = arith.addi %1, %c0_i32_9 : i32
    %c3_i32 = arith.constant 3 : i32
    %24 = arith.addi %23, %c3_i32 : i32
    %25 = arith.index_cast %24 : i32 to index
    %26 = memref.load %arg1[%25] : memref<32xi32, #tpu.memory_space<smem>>
    %27 = arith.index_cast %26 : i32 to index
    %c0_10 = arith.constant 0 : index
    %28 = vector.load %arg2[%27, %c0_10] : memref<32x16xf32, #tpu.memory_space<vmem>>, vector<1x16xf32>
    %c0_11 = arith.constant 0 : index
    %c48 = arith.constant 48 : index
    %29 = vector.load %arg8[%c0_11, %c48] : memref<4x128xf32, #tpu.memory_space<vmem>>, vector<1x16xf32>
    tpu.vector_store %arg8[%c0_11, %c48], %28 {strides = array<i32>} : memref<4x128xf32, #tpu.memory_space<vmem>>, vector<1x16xf32>,
    %c0_i32_12 = arith.constant 0 : i32
    %30 = arith.addi %1, %c0_i32_12 : i32
    %c4_i32_13 = arith.constant 4 : i32
    %31 = arith.addi %30, %c4_i32_13 : i32
    %32 = arith.index_cast %31 : i32 to index
    %33 = memref.load %arg1[%32] : memref<32xi32, #tpu.memory_space<smem>>
    %34 = arith.index_cast %33 : i32 to index
    %c0_14 = arith.constant 0 : index
    %35 = vector.load %arg2[%34, %c0_14] : memref<32x16xf32, #tpu.memory_space<vmem>>, vector<1x16xf32>
    %c0_15 = arith.constant 0 : index
    %c64 = arith.constant 64 : index
    %36 = vector.load %arg8[%c0_15, %c64] : memref<4x128xf32, #tpu.memory_space<vmem>>, vector<1x16xf32>
    tpu.vector_store %arg8[%c0_15, %c64], %35 {strides = array<i32>} : memref<4x128xf32, #tpu.memory_space<vmem>>, vector<1x16xf32>,
    %c0_i32_16 = arith.constant 0 : i32
    %37 = arith.addi %1, %c0_i32_16 : i32
    %c5_i32 = arith.constant 5 : i32
    %38 = arith.addi %37, %c5_i32 : i32
    %39 = arith.index_cast %38 : i32 to index
    %40 = memref.load %arg1[%39] : memref<32xi32, #tpu.memory_space<smem>>
    %41 = arith.index_cast %40 : i32 to index
    %c0_17 = arith.constant 0 : index
    %42 = vector.load %arg2[%41, %c0_17] : memref<32x16xf32, #tpu.memory_space<vmem>>, vector<1x16xf32>
    %c0_18 = arith.constant 0 : index
    %c80 = arith.constant 80 : index
    %43 = vector.load %arg8[%c0_18, %c80] : memref<4x128xf32, #tpu.memory_space<vmem>>, vector<1x16xf32>
    tpu.vector_store %arg8[%c0_18, %c80], %42 {strides = array<i32>} : memref<4x128xf32, #tpu.memory_space<vmem>>, vector<1x16xf32>,
    %c0_i32_19 = arith.constant 0 : i32
    %44 = arith.addi %1, %c0_i32_19 : i32
    %c6_i32 = arith.constant 6 : i32
    %45 = arith.addi %44, %c6_i32 : i32
    %46 = arith.index_cast %45 : i32 to index
    %47 = memref.load %arg1[%46] : memref<32xi32, #tpu.memory_space<smem>>
    %48 = arith.index_cast %47 : i32 to index
    %c0_20 = arith.constant 0 : index
    %49 = vector.load %arg2[%48, %c0_20] : memref<32x16xf32, #tpu.memory_space<vmem>>, vector<1x16xf32>
    %c0_21 = arith.constant 0 : index
    %c96 = arith.constant 96 : index
    %50 = vector.load %arg8[%c0_21, %c96] : memref<4x128xf32, #tpu.memory_space<vmem>>, vector<1x16xf32>
    tpu.vector_store %arg8[%c0_21, %c96], %49 {strides = array<i32>} : memref<4x128xf32, #tpu.memory_space<vmem>>, vector<1x16xf32>,
    %c0_i32_22 = arith.constant 0 : i32
    %51 = arith.addi %1, %c0_i32_22 : i32
    %c7_i32 = arith.constant 7 : i32
    %52 = arith.addi %51, %c7_i32 : i32
    %53 = arith.index_cast %52 : i32 to index
    %54 = memref.load %arg1[%53] : memref<32xi32, #tpu.memory_space<smem>>
    %55 = arith.index_cast %54 : i32 to index
    %c0_23 = arith.constant 0 : index
    %56 = vector.load %arg2[%55, %c0_23] : memref<32x16xf32, #tpu.memory_space<vmem>>, vector<1x16xf32>
    %c0_24 = arith.constant 0 : index
    %c112 = arith.constant 112 : index
    %57 = vector.load %arg8[%c0_24, %c112] : memref<4x128xf32, #tpu.memory_space<vmem>>, vector<1x16xf32>
    tpu.vector_store %arg8[%c0_24, %c112], %56 {strides = array<i32>} : memref<4x128xf32, #tpu.memory_space<vmem>>, vector<1x16xf32>,
    %c8_i32_25 = arith.constant 8 : i32
    %58 = arith.addi %1, %c8_i32_25 : i32
    %c0_i32_26 = arith.constant 0 : i32
    %59 = arith.addi %58, %c0_i32_26 : i32
    %60 = arith.index_cast %59 : i32 to index
    %61 = memref.load %arg1[%60] : memref<32xi32, #tpu.memory_space<smem>>
    %62 = arith.index_cast %61 : i32 to index
    %c0_27 = arith.constant 0 : index
    %63 = vector.load %arg2[%62, %c0_27] : memref<32x16xf32, #tpu.memory_space<vmem>>, vector<1x16xf32>
    %c1 = arith.constant 1 : index
    %c0_28 = arith.constant 0 : index
    %64 = vector.load %arg8[%c1, %c0_28] : memref<4x128xf32, #tpu.memory_space<vmem>>, vector<1x16xf32>
    tpu.vector_store %arg8[%c1, %c0_28], %63 {strides = array<i32>} : memref<4x128xf32, #tpu.memory_space<vmem>>, vector<1x16xf32>,
    %c8_i32_29 = arith.constant 8 : i32
    %65 = arith.addi %1, %c8_i32_29 : i32
    %c1_i32_30 = arith.constant 1 : i32
    %66 = arith.addi %65, %c1_i32_30 : i32
    %67 = arith.index_cast %66 : i32 to index
    %68 = memref.load %arg1[%67] : memref<32xi32, #tpu.memory_space<smem>>
    %69 = arith.index_cast %68 : i32 to index
    %c0_31 = arith.constant 0 : index
    %70 = vector.load %arg2[%69, %c0_31] : memref<32x16xf32, #tpu.memory_space<vmem>>, vector<1x16xf32>
    %c1_32 = arith.constant 1 : index
    %c16_33 = arith.constant 16 : index
    %71 = vector.load %arg8[%c1_32, %c16_33] : memref<4x128xf32, #tpu.memory_space<vmem>>, vector<1x16xf32>
    tpu.vector_store %arg8[%c1_32, %c16_33], %70 {strides = array<i32>} : memref<4x128xf32, #tpu.memory_space<vmem>>, vector<1x16xf32>,
    %c8_i32_34 = arith.constant 8 : i32
    %72 = arith.addi %1, %c8_i32_34 : i32
    %c2_i32_35 = arith.constant 2 : i32
    %73 = arith.addi %72, %c2_i32_35 : i32
    %74 = arith.index_cast %73 : i32 to index
    %75 = memref.load %arg1[%74] : memref<32xi32, #tpu.memory_space<smem>>
    %76 = arith.index_cast %75 : i32 to index
    %c0_36 = arith.constant 0 : index
    %77 = vector.load %arg2[%76, %c0_36] : memref<32x16xf32, #tpu.memory_space<vmem>>, vector<1x16xf32>
    %c1_37 = arith.constant 1 : index
    %c32_38 = arith.constant 32 : index
    %78 = vector.load %arg8[%c1_37, %c32_38] : memref<4x128xf32, #tpu.memory_space<vmem>>, vector<1x16xf32>
    tpu.vector_store %arg8[%c1_37, %c32_38], %77 {strides = array<i32>} : memref<4x128xf32, #tpu.memory_space<vmem>>, vector<1x16xf32>,
    %c8_i32_39 = arith.constant 8 : i32
    %79 = arith.addi %1, %c8_i32_39 : i32
    %c3_i32_40 = arith.constant 3 : i32
    %80 = arith.addi %79, %c3_i32_40 : i32
    %81 = arith.index_cast %80 : i32 to index
    %82 = memref.load %arg1[%81] : memref<32xi32, #tpu.memory_space<smem>>
    %83 = arith.index_cast %82 : i32 to index
    %c0_41 = arith.constant 0 : index
    %84 = vector.load %arg2[%83, %c0_41] : memref<32x16xf32, #tpu.memory_space<vmem>>, vector<1x16xf32>
    %c1_42 = arith.constant 1 : index
    %c48_43 = arith.constant 48 : index
    %85 = vector.load %arg8[%c1_42, %c48_43] : memref<4x128xf32, #tpu.memory_space<vmem>>, vector<1x16xf32>
    tpu.vector_store %arg8[%c1_42, %c48_43], %84 {strides = array<i32>} : memref<4x128xf32, #tpu.memory_space<vmem>>, vector<1x16xf32>,
    %c8_i32_44 = arith.constant 8 : i32
    %86 = arith.addi %1, %c8_i32_44 : i32
    %c4_i32_45 = arith.constant 4 : i32
    %87 = arith.addi %86, %c4_i32_45 : i32
    %88 = arith.index_cast %87 : i32 to index
    %89 = memref.load %arg1[%88] : memref<32xi32, #tpu.memory_space<smem>>
    %90 = arith.index_cast %89 : i32 to index
    %c0_46 = arith.constant 0 : index
    %91 = vector.load %arg2[%90, %c0_46] : memref<32x16xf32, #tpu.memory_space<vmem>>, vector<1x16xf32>
    %c1_47 = arith.constant 1 : index
    %c64_48 = arith.constant 64 : index
    %92 = vector.load %arg8[%c1_47, %c64_48] : memref<4x128xf32, #tpu.memory_space<vmem>>, vector<1x16xf32>
    tpu.vector_store %arg8[%c1_47, %c64_48], %91 {strides = array<i32>} : memref<4x128xf32, #tpu.memory_space<vmem>>, vector<1x16xf32>,
    %c8_i32_49 = arith.constant 8 : i32
    %93 = arith.addi %1, %c8_i32_49 : i32
    %c5_i32_50 = arith.constant 5 : i32
    %94 = arith.addi %93, %c5_i32_50 : i32
    %95 = arith.index_cast %94 : i32 to index
    %96 = memref.load %arg1[%95] : memref<32xi32, #tpu.memory_space<smem>>
    %97 = arith.index_cast %96 : i32 to index
    %c0_51 = arith.constant 0 : index
    %98 = vector.load %arg2[%97, %c0_51] : memref<32x16xf32, #tpu.memory_space<vmem>>, vector<1x16xf32>
    %c1_52 = arith.constant 1 : index
    %c80_53 = arith.constant 80 : index
    %99 = vector.load %arg8[%c1_52, %c80_53] : memref<4x128xf32, #tpu.memory_space<vmem>>, vector<1x16xf32>
    tpu.vector_store %arg8[%c1_52, %c80_53], %98 {strides = array<i32>} : memref<4x128xf32, #tpu.memory_space<vmem>>, vector<1x16xf32>,
    %c8_i32_54 = arith.constant 8 : i32
    %100 = arith.addi %1, %c8_i32_54 : i32
    %c6_i32_55 = arith.constant 6 : i32
    %101 = arith.addi %100, %c6_i32_55 : i32
    %102 = arith.index_cast %101 : i32 to index
    %103 = memref.load %arg1[%102] : memref<32xi32, #tpu.memory_space<smem>>
    %104 = arith.index_cast %103 : i32 to index
    %c0_56 = arith.constant 0 : index
    %105 = vector.load %arg2[%104, %c0_56] : memref<32x16xf32, #tpu.memory_space<vmem>>, vector<1x16xf32>
    %c1_57 = arith.constant 1 : index
    %c96_58 = arith.constant 96 : index
    %106 = vector.load %arg8[%c1_57, %c96_58] : memref<4x128xf32, #tpu.memory_space<vmem>>, vector<1x16xf32>
    tpu.vector_store %arg8[%c1_57, %c96_58], %105 {strides = array<i32>} : memref<4x128xf32, #tpu.memory_space<vmem>>, vector<1x16xf32>,
    %c8_i32_59 = arith.constant 8 : i32
    %107 = arith.addi %1, %c8_i32_59 : i32
    %c7_i32_60 = arith.constant 7 : i32
    %108 = arith.addi %107, %c7_i32_60 : i32
    %109 = arith.index_cast %108 : i32 to index
    %110 = memref.load %arg1[%109] : memref<32xi32, #tpu.memory_space<smem>>
    %111 = arith.index_cast %110 : i32 to index
    %c0_61 = arith.constant 0 : index
    %112 = vector.load %arg2[%111, %c0_61] : memref<32x16xf32, #tpu.memory_space<vmem>>, vector<1x16xf32>
    %c1_62 = arith.constant 1 : index
    %c112_63 = arith.constant 112 : index
    %113 = vector.load %arg8[%c1_62, %c112_63] : memref<4x128xf32, #tpu.memory_space<vmem>>, vector<1x16xf32>
    tpu.vector_store %arg8[%c1_62, %c112_63], %112 {strides = array<i32>} : memref<4x128xf32, #tpu.memory_space<vmem>>, vector<1x16xf32>,
    %c16_i32 = arith.constant 16 : i32
    %114 = arith.addi %1, %c16_i32 : i32
    %c0_i32_64 = arith.constant 0 : i32
    %115 = arith.addi %114, %c0_i32_64 : i32
    %116 = arith.index_cast %115 : i32 to index
    %117 = memref.load %arg1[%116] : memref<32xi32, #tpu.memory_space<smem>>
    %118 = arith.index_cast %117 : i32 to index
    %c0_65 = arith.constant 0 : index
    %119 = vector.load %arg2[%118, %c0_65] : memref<32x16xf32, #tpu.memory_space<vmem>>, vector<1x16xf32>
    %c2 = arith.constant 2 : index
    %c0_66 = arith.constant 0 : index
    %120 = vector.load %arg8[%c2, %c0_66] : memref<4x128xf32, #tpu.memory_space<vmem>>, vector<1x16xf32>
    tpu.vector_store %arg8[%c2, %c0_66], %119 {strides = array<i32>} : memref<4x128xf32, #tpu.memory_space<vmem>>, vector<1x16xf32>,
    %c16_i32_67 = arith.constant 16 : i32
    %121 = arith.addi %1, %c16_i32_67 : i32
    %c1_i32_68 = arith.constant 1 : i32
    %122 = arith.addi %121, %c1_i32_68 : i32
    %123 = arith.index_cast %122 : i32 to index
    %124 = memref.load %arg1[%123] : memref<32xi32, #tpu.memory_space<smem>>
    %125 = arith.index_cast %124 : i32 to index
    %c0_69 = arith.constant 0 : index
    %126 = vector.load %arg2[%125, %c0_69] : memref<32x16xf32, #tpu.memory_space<vmem>>, vector<1x16xf32>
    %c2_70 = arith.constant 2 : index
    %c16_71 = arith.constant 16 : index
    %127 = vector.load %arg8[%c2_70, %c16_71] : memref<4x128xf32, #tpu.memory_space<vmem>>, vector<1x16xf32>
    tpu.vector_store %arg8[%c2_70, %c16_71], %126 {strides = array<i32>} : memref<4x128xf32, #tpu.memory_space<vmem>>, vector<1x16xf32>,
    %c16_i32_72 = arith.constant 16 : i32
    %128 = arith.addi %1, %c16_i32_72 : i32
    %c2_i32_73 = arith.constant 2 : i32
    %129 = arith.addi %128, %c2_i32_73 : i32
    %130 = arith.index_cast %129 : i32 to index
    %131 = memref.load %arg1[%130] : memref<32xi32, #tpu.memory_space<smem>>
    %132 = arith.index_cast %131 : i32 to index
    %c0_74 = arith.constant 0 : index
    %133 = vector.load %arg2[%132, %c0_74] : memref<32x16xf32, #tpu.memory_space<vmem>>, vector<1x16xf32>
    %c2_75 = arith.constant 2 : index
    %c32_76 = arith.constant 32 : index
    %134 = vector.load %arg8[%c2_75, %c32_76] : memref<4x128xf32, #tpu.memory_space<vmem>>, vector<1x16xf32>
    tpu.vector_store %arg8[%c2_75, %c32_76], %133 {strides = array<i32>} : memref<4x128xf32, #tpu.memory_space<vmem>>, vector<1x16xf32>,
    %c16_i32_77 = arith.constant 16 : i32
    %135 = arith.addi %1, %c16_i32_77 : i32
    %c3_i32_78 = arith.constant 3 : i32
    %136 = arith.addi %135, %c3_i32_78 : i32
    %137 = arith.index_cast %136 : i32 to index
    %138 = memref.load %arg1[%137] : memref<32xi32, #tpu.memory_space<smem>>
    %139 = arith.index_cast %138 : i32 to index
    %c0_79 = arith.constant 0 : index
    %140 = vector.load %arg2[%139, %c0_79] : memref<32x16xf32, #tpu.memory_space<vmem>>, vector<1x16xf32>
    %c2_80 = arith.constant 2 : index
    %c48_81 = arith.constant 48 : index
    %141 = vector.load %arg8[%c2_80, %c48_81] : memref<4x128xf32, #tpu.memory_space<vmem>>, vector<1x16xf32>
    tpu.vector_store %arg8[%c2_80, %c48_81], %140 {strides = array<i32>} : memref<4x128xf32, #tpu.memory_space<vmem>>, vector<1x16xf32>,
    %c16_i32_82 = arith.constant 16 : i32
    %142 = arith.addi %1, %c16_i32_82 : i32
    %c4_i32_83 = arith.constant 4 : i32
    %143 = arith.addi %142, %c4_i32_83 : i32
    %144 = arith.index_cast %143 : i32 to index
    %145 = memref.load %arg1[%144] : memref<32xi32, #tpu.memory_space<smem>>
    %146 = arith.index_cast %145 : i32 to index
    %c0_84 = arith.constant 0 : index
    %147 = vector.load %arg2[%146, %c0_84] : memref<32x16xf32, #tpu.memory_space<vmem>>, vector<1x16xf32>
    %c2_85 = arith.constant 2 : index
    %c64_86 = arith.constant 64 : index
    %148 = vector.load %arg8[%c2_85, %c64_86] : memref<4x128xf32, #tpu.memory_space<vmem>>, vector<1x16xf32>
    tpu.vector_store %arg8[%c2_85, %c64_86], %147 {strides = array<i32>} : memref<4x128xf32, #tpu.memory_space<vmem>>, vector<1x16xf32>,
    %c16_i32_87 = arith.constant 16 : i32
    %149 = arith.addi %1, %c16_i32_87 : i32
    %c5_i32_88 = arith.constant 5 : i32
    %150 = arith.addi %149, %c5_i32_88 : i32
    %151 = arith.index_cast %150 : i32 to index
    %152 = memref.load %arg1[%151] : memref<32xi32, #tpu.memory_space<smem>>
    %153 = arith.index_cast %152 : i32 to index
    %c0_89 = arith.constant 0 : index
    %154 = vector.load %arg2[%153, %c0_89] : memref<32x16xf32, #tpu.memory_space<vmem>>, vector<1x16xf32>
    %c2_90 = arith.constant 2 : index
    %c80_91 = arith.constant 80 : index
    %155 = vector.load %arg8[%c2_90, %c80_91] : memref<4x128xf32, #tpu.memory_space<vmem>>, vector<1x16xf32>
    tpu.vector_store %arg8[%c2_90, %c80_91], %154 {strides = array<i32>} : memref<4x128xf32, #tpu.memory_space<vmem>>, vector<1x16xf32>,
    %c16_i32_92 = arith.constant 16 : i32
    %156 = arith.addi %1, %c16_i32_92 : i32
    %c6_i32_93 = arith.constant 6 : i32
    %157 = arith.addi %156, %c6_i32_93 : i32
    %158 = arith.index_cast %157 : i32 to index
    %159 = memref.load %arg1[%158] : memref<32xi32, #tpu.memory_space<smem>>
    %160 = arith.index_cast %159 : i32 to index
    %c0_94 = arith.constant 0 : index
    %161 = vector.load %arg2[%160, %c0_94] : memref<32x16xf32, #tpu.memory_space<vmem>>, vector<1x16xf32>
    %c2_95 = arith.constant 2 : index
    %c96_96 = arith.constant 96 : index
    %162 = vector.load %arg8[%c2_95, %c96_96] : memref<4x128xf32, #tpu.memory_space<vmem>>, vector<1x16xf32>
    tpu.vector_store %arg8[%c2_95, %c96_96], %161 {strides = array<i32>} : memref<4x128xf32, #tpu.memory_space<vmem>>, vector<1x16xf32>,
    %c16_i32_97 = arith.constant 16 : i32
    %163 = arith.addi %1, %c16_i32_97 : i32
    %c7_i32_98 = arith.constant 7 : i32
    %164 = arith.addi %163, %c7_i32_98 : i32
    %165 = arith.index_cast %164 : i32 to index
    %166 = memref.load %arg1[%165] : memref<32xi32, #tpu.memory_space<smem>>
    %167 = arith.index_cast %166 : i32 to index
    %c0_99 = arith.constant 0 : index
    %168 = vector.load %arg2[%167, %c0_99] : memref<32x16xf32, #tpu.memory_space<vmem>>, vector<1x16xf32>
    %c2_100 = arith.constant 2 : index
    %c112_101 = arith.constant 112 : index
    %169 = vector.load %arg8[%c2_100, %c112_101] : memref<4x128xf32, #tpu.memory_space<vmem>>, vector<1x16xf32>
    tpu.vector_store %arg8[%c2_100, %c112_101], %168 {strides = array<i32>} : memref<4x128xf32, #tpu.memory_space<vmem>>, vector<1x16xf32>,
    %c24_i32 = arith.constant 24 : i32
    %170 = arith.addi %1, %c24_i32 : i32
    %c0_i32_102 = arith.constant 0 : i32
    %171 = arith.addi %170, %c0_i32_102 : i32
    %172 = arith.index_cast %171 : i32 to index
    %173 = memref.load %arg1[%172] : memref<32xi32, #tpu.memory_space<smem>>
    %174 = arith.index_cast %173 : i32 to index
    %c0_103 = arith.constant 0 : index
    %175 = vector.load %arg2[%174, %c0_103] : memref<32x16xf32, #tpu.memory_space<vmem>>, vector<1x16xf32>
    %c3 = arith.constant 3 : index
    %c0_104 = arith.constant 0 : index
    %176 = vector.load %arg8[%c3, %c0_104] : memref<4x128xf32, #tpu.memory_space<vmem>>, vector<1x16xf32>
    tpu.vector_store %arg8[%c3, %c0_104], %175 {strides = array<i32>} : memref<4x128xf32, #tpu.memory_space<vmem>>, vector<1x16xf32>,
    %c24_i32_105 = arith.constant 24 : i32
    %177 = arith.addi %1, %c24_i32_105 : i32
    %c1_i32_106 = arith.constant 1 : i32
    %178 = arith.addi %177, %c1_i32_106 : i32
    %179 = arith.index_cast %178 : i32 to index
    %180 = memref.load %arg1[%179] : memref<32xi32, #tpu.memory_space<smem>>
    %181 = arith.index_cast %180 : i32 to index
    %c0_107 = arith.constant 0 : index
    %182 = vector.load %arg2[%181, %c0_107] : memref<32x16xf32, #tpu.memory_space<vmem>>, vector<1x16xf32>
    %c3_108 = arith.constant 3 : index
    %c16_109 = arith.constant 16 : index
    %183 = vector.load %arg8[%c3_108, %c16_109] : memref<4x128xf32, #tpu.memory_space<vmem>>, vector<1x16xf32>
    tpu.vector_store %arg8[%c3_108, %c16_109], %182 {strides = array<i32>} : memref<4x128xf32, #tpu.memory_space<vmem>>, vector<1x16xf32>,
    %c24_i32_110 = arith.constant 24 : i32
    %184 = arith.addi %1, %c24_i32_110 : i32
    %c2_i32_111 = arith.constant 2 : i32
    %185 = arith.addi %184, %c2_i32_111 : i32
    %186 = arith.index_cast %185 : i32 to index
    %187 = memref.load %arg1[%186] : memref<32xi32, #tpu.memory_space<smem>>
    %188 = arith.index_cast %187 : i32 to index
    %c0_112 = arith.constant 0 : index
    %189 = vector.load %arg2[%188, %c0_112] : memref<32x16xf32, #tpu.memory_space<vmem>>, vector<1x16xf32>
    %c3_113 = arith.constant 3 : index
    %c32_114 = arith.constant 32 : index
    %190 = vector.load %arg8[%c3_113, %c32_114] : memref<4x128xf32, #tpu.memory_space<vmem>>, vector<1x16xf32>
    tpu.vector_store %arg8[%c3_113, %c32_114], %189 {strides = array<i32>} : memref<4x128xf32, #tpu.memory_space<vmem>>, vector<1x16xf32>,
    %c24_i32_115 = arith.constant 24 : i32
    %191 = arith.addi %1, %c24_i32_115 : i32
    %c3_i32_116 = arith.constant 3 : i32
    %192 = arith.addi %191, %c3_i32_116 : i32
    %193 = arith.index_cast %192 : i32 to index
    %194 = memref.load %arg1[%193] : memref<32xi32, #tpu.memory_space<smem>>
    %195 = arith.index_cast %194 : i32 to index
    %c0_117 = arith.constant 0 : index
    %196 = vector.load %arg2[%195, %c0_117] : memref<32x16xf32, #tpu.memory_space<vmem>>, vector<1x16xf32>
    %c3_118 = arith.constant 3 : index
    %c48_119 = arith.constant 48 : index
    %197 = vector.load %arg8[%c3_118, %c48_119] : memref<4x128xf32, #tpu.memory_space<vmem>>, vector<1x16xf32>
    tpu.vector_store %arg8[%c3_118, %c48_119], %196 {strides = array<i32>} : memref<4x128xf32, #tpu.memory_space<vmem>>, vector<1x16xf32>,
    %c24_i32_120 = arith.constant 24 : i32
    %198 = arith.addi %1, %c24_i32_120 : i32
    %c4_i32_121 = arith.constant 4 : i32
    %199 = arith.addi %198, %c4_i32_121 : i32
    %200 = arith.index_cast %199 : i32 to index
    %201 = memref.load %arg1[%200] : memref<32xi32, #tpu.memory_space<smem>>
    %202 = arith.index_cast %201 : i32 to index
    %c0_122 = arith.constant 0 : index
    %203 = vector.load %arg2[%202, %c0_122] : memref<32x16xf32, #tpu.memory_space<vmem>>, vector<1x16xf32>
    %c3_123 = arith.constant 3 : index
    %c64_124 = arith.constant 64 : index
    %204 = vector.load %arg8[%c3_123, %c64_124] : memref<4x128xf32, #tpu.memory_space<vmem>>, vector<1x16xf32>
    tpu.vector_store %arg8[%c3_123, %c64_124], %203 {strides = array<i32>} : memref<4x128xf32, #tpu.memory_space<vmem>>, vector<1x16xf32>,
    %c24_i32_125 = arith.constant 24 : i32
    %205 = arith.addi %1, %c24_i32_125 : i32
    %c5_i32_126 = arith.constant 5 : i32
    %206 = arith.addi %205, %c5_i32_126 : i32
    %207 = arith.index_cast %206 : i32 to index
    %208 = memref.load %arg1[%207] : memref<32xi32, #tpu.memory_space<smem>>
    %209 = arith.index_cast %208 : i32 to index
    %c0_127 = arith.constant 0 : index
    %210 = vector.load %arg2[%209, %c0_127] : memref<32x16xf32, #tpu.memory_space<vmem>>, vector<1x16xf32>
    %c3_128 = arith.constant 3 : index
    %c80_129 = arith.constant 80 : index
    %211 = vector.load %arg8[%c3_128, %c80_129] : memref<4x128xf32, #tpu.memory_space<vmem>>, vector<1x16xf32>
    tpu.vector_store %arg8[%c3_128, %c80_129], %210 {strides = array<i32>} : memref<4x128xf32, #tpu.memory_space<vmem>>, vector<1x16xf32>,
    %c24_i32_130 = arith.constant 24 : i32
    %212 = arith.addi %1, %c24_i32_130 : i32
    %c6_i32_131 = arith.constant 6 : i32
    %213 = arith.addi %212, %c6_i32_131 : i32
    %214 = arith.index_cast %213 : i32 to index
    %215 = memref.load %arg1[%214] : memref<32xi32, #tpu.memory_space<smem>>
    %216 = arith.index_cast %215 : i32 to index
    %c0_132 = arith.constant 0 : index
    %217 = vector.load %arg2[%216, %c0_132] : memref<32x16xf32, #tpu.memory_space<vmem>>, vector<1x16xf32>
    %c3_133 = arith.constant 3 : index
    %c96_134 = arith.constant 96 : index
    %218 = vector.load %arg8[%c3_133, %c96_134] : memref<4x128xf32, #tpu.memory_space<vmem>>, vector<1x16xf32>
    tpu.vector_store %arg8[%c3_133, %c96_134], %217 {strides = array<i32>} : memref<4x128xf32, #tpu.memory_space<vmem>>, vector<1x16xf32>,
    %c24_i32_135 = arith.constant 24 : i32
    %219 = arith.addi %1, %c24_i32_135 : i32
    %c7_i32_136 = arith.constant 7 : i32
    %220 = arith.addi %219, %c7_i32_136 : i32
    %221 = arith.index_cast %220 : i32 to index
    %222 = memref.load %arg1[%221] : memref<32xi32, #tpu.memory_space<smem>>
    %223 = arith.index_cast %222 : i32 to index
    %c0_137 = arith.constant 0 : index
    %224 = vector.load %arg2[%223, %c0_137] : memref<32x16xf32, #tpu.memory_space<vmem>>, vector<1x16xf32>
    %c3_138 = arith.constant 3 : index
    %c112_139 = arith.constant 112 : index
    %225 = vector.load %arg8[%c3_138, %c112_139] : memref<4x128xf32, #tpu.memory_space<vmem>>, vector<1x16xf32>
    tpu.vector_store %arg8[%c3_138, %c112_139], %224 {strides = array<i32>} : memref<4x128xf32, #tpu.memory_space<vmem>>, vector<1x16xf32>,
    %c0_140 = arith.constant 0 : index
    %c0_141 = arith.constant 0 : index
    %226 = vector.load %arg8[%c0_140, %c0_141] : memref<4x128xf32, #tpu.memory_space<vmem>>, vector<4x128xf32>
    %c0_142 = arith.constant 0 : index
    %c0_143 = arith.constant 0 : index
    %227 = vector.load %arg3[%c0_142, %c0_143] : memref<128x32xf32, #tpu.memory_space<vmem>>, vector<128x32xf32>
    %cst = arith.constant dense<0.000000e+00> : vector<4x32xf32>
    %228 = tpu.matmul %226, %227, %cst {dimension_numbers = #tpu.dot_dimension_numbers<[1], [0], [0], [1], [0, 0, 1, 1], [], []>} : vector<4x128xf32>, vector<128x32xf32>, vector<4x32xf32> -> vector<4x32xf32>
    %c0_144 = arith.constant 0 : index
    %c0_145 = arith.constant 0 : index
    %229 = vector.load %arg4[%c0_144, %c0_145] : memref<1x32xf32, #tpu.memory_space<vmem>>, vector<1x32xf32>
    %230 = vector.broadcast %229 : vector<1x32xf32> to vector<4x32xf32>
    %231 = arith.addf %228, %230 : vector<4x32xf32>
    %cst_146 = arith.constant 0.000000e+00 : f32
    %232 = vector.broadcast %cst_146 : f32 to vector<4x32xf32>
    %233 = arith.maximumf %231, %232 : vector<4x32xf32>
    %c0_147 = arith.constant 0 : index
    %c0_148 = arith.constant 0 : index
    %234 = vector.load %arg5[%c0_147, %c0_148] : memref<1x32xf32, #tpu.memory_space<vmem>>, vector<1x32xf32>
    %cst_149 = arith.constant dense<0.000000e+00> : vector<1x4xf32>
    %235 = tpu.matmul %234, %233, %cst_149 {dimension_numbers = #tpu.dot_dimension_numbers<[1], [1], [0], [0], [0, 0, 1, 0], [], []>} : vector<1x32xf32>, vector<4x32xf32>, vector<1x4xf32> -> vector<1x4xf32>
    %c0_150 = arith.constant 0 : index
    %c0_151 = arith.constant 0 : index
    %236 = vector.load %arg6[%c0_150, %c0_151] : memref<1x1xf32, #tpu.memory_space<vmem>>, vector<1x1xf32>
    %237 = vector.broadcast %236 : vector<1x1xf32> to vector<1x4xf32>
    %238 = arith.addf %235, %237 : vector<1x4xf32>
    %c0_152 = arith.constant 0 : index
    %c0_153 = arith.constant 0 : index
    %239 = vector.load %arg7[%c0_152, %c0_153] : memref<1x4xf32, #tpu.memory_space<vmem>>, vector<1x4xf32>
    tpu.vector_store %arg7[%c0_152, %c0_153], %238 {strides = array<i32>} : memref<1x4xf32, #tpu.memory_space<vmem>>, vector<1x4xf32>,
    return
  }
  func.func @transform_0(%arg0: i32, %arg1: memref<32xi32, #tpu.memory_space<smem>>) -> (i32, i32) {
    %c0_i32 = arith.constant 0 : i32
    %c0_i32_0 = arith.constant 0 : i32
    %c0_i32_1 = arith.constant 0 : i32
    return %c0_i32, %c0_i32_0 : i32, i32
  }
  func.func @transform_1(%arg0: i32, %arg1: memref<32xi32, #tpu.memory_space<smem>>) -> (i32, i32) {
    %c0_i32 = arith.constant 0 : i32
    %c0_i32_0 = arith.constant 0 : i32
    %c0_i32_1 = arith.constant 0 : i32
    return %c0_i32, %c0_i32_0 : i32, i32
  }
  func.func @transform_2(%arg0: i32, %arg1: memref<32xi32, #tpu.memory_space<smem>>) -> (i32, i32) {
    %c0_i32 = arith.constant 0 : i32
    %c0_i32_0 = arith.constant 0 : i32
    %c0_i32_1 = arith.constant 0 : i32
    return %c0_i32, %c0_i32_0 : i32, i32
  }
  func.func @transform_3(%arg0: i32, %arg1: memref<32xi32, #tpu.memory_space<smem>>) -> (i32, i32) {
    %c0_i32 = arith.constant 0 : i32
    %c0_i32_0 = arith.constant 0 : i32
    %c0_i32_1 = arith.constant 0 : i32
    return %c0_i32, %c0_i32_0 : i32, i32
  }
  func.func @transform_4(%arg0: i32, %arg1: memref<32xi32, #tpu.memory_space<smem>>) -> (i32, i32) {
    %c0_i32 = arith.constant 0 : i32
    %c0_i32_0 = arith.constant 0 : i32
    %c0_i32_1 = arith.constant 0 : i32
    return %c0_i32, %c0_i32_0 : i32, i32
  }
  func.func @transform_5(%arg0: i32, %arg1: memref<32xi32, #tpu.memory_space<smem>>) -> (i32, i32) {
    %c0_i32 = arith.constant 0 : i32
    %c0_i32_0 = arith.constant 0 : i32
    return %c0_i32, %arg0 : i32, i32
  }
}

</mosaic_0001>

<llo_original>
// kernel: tpu_custom_call.1
$region0: #{tpu_custom_call.1}
  #allocation0 [shape = 'u32[]', space=smem, size = 0x4, offset = 0x4, fixed_abs, tag = 'smem constant byte address 0x4 - core index']
  #allocation1 [shape = 'u32[144,128]{1,0:T(1,128)}', space=vmem, size = 0x12000, scoped, tag = 'internal scratch']
  #allocation2 [shape = 'f32[4,128]{1,0:T(4,128)}', space=vmem, size = 0x800, scoped, tag = 'scratch operand']
  #allocation3 [shape = 's32[1]{0}', space=sflag, size = 0x4, scoped, tag = 'scoped memory for tpu_custom_call.1']
  #allocation4 [shape = 'u8[512]{0}', space=smem, size = 0x200, scoped, tag = 'prefetched SMEM operand 0']
  #allocation5 [shape = 'f32[1,1]{1,0:T(1,128)S(1)}', space=vmem, size = 0x200, scoped, tag = 'scoped memory for tpu_custom_call.1']
  %s0 = inlined_call_operand.vmem [shape: s32[32], index: 0, kind: input, shape index: {}]
  %s1 = inlined_call_operand.vmem [shape: f32[32,16], index: 1, kind: input, shape index: {}]
  %s2 = inlined_call_operand.vmem [shape: f32[128,32], index: 2, kind: input, shape index: {}]
  %s3 = inlined_call_operand.vmem [shape: f32[1,32], index: 3, kind: input, shape index: {}]
  %s4 = inlined_call_operand.vmem [shape: f32[1,32], index: 4, kind: input, shape index: {}]
  %s5 = inlined_call_operand.<no memory space> [shape: f32[1,1], index: 5, kind: input, shape index: {}]
  %s6 = inlined_call_operand.hbm [shape: f32[1,4], index: 6, kind: output, shape index: {}]
  %s7 = sld [smem:[#allocation0]]
  $region30: #{tpu_custom_call.1} parent=0
    _
  %s9 = ssub.s32 1, %s7
  %s10 = scalar_select 0, %s9, %s7
  %s11 = sshll.u32 %s0, 4
  %s12 = int_to_ptr.vmem [resolvable:$true] %s11
  %14 = dma.vmem_to_smem %s12, 16, [#allocation4], [#allocation3]
  %v15 = vstv %s5
  %16 = vst [vmem:[#allocation5] sm:$0x1] %v15
  %17 = dma.done [#allocation3], 16
  %18 = sfence
  $region1: #{tpu_custom_call.1} parent=0
    #allocation6 [shape = 'u8[512]{0}', space=vmem, size = 0x400, scoped, tag = 'output window, operand 0, single buffered']
    #allocation7 [shape = 's32[1]{0}', space=sflag, size = 0x4, scoped, tag = 'scoped memory for tpu_custom_call.1']
    %19 = vsyncpa [#allocation7], 0
    // Predicated region
    $region2: #{tpu_custom_call.1} parent=1 // pred_check
      _
    $region3: #{tpu_custom_call.1} parent=1 // pred_check_branch
      %21 = sbr.rel (0) target = $region5
    $region4: #{tpu_custom_call.1} parent=1 // pred_region
      _
    $region5: #{tpu_custom_call.1} parent=1 // pred_fallthru
      _
    // Predicated region
    $region6: #{tpu_custom_call.1} parent=1 // pred_check
      _
    $region7: #{tpu_custom_call.1} parent=1 // pred_check_branch
      %23 = sbr.rel (0) target = $region9
    $region8: #{tpu_custom_call.1} parent=1 // pred_region
      _
    $region9: #{tpu_custom_call.1} parent=1 // pred_fallthru
      _
    // Predicated region
    $region10: #{tpu_custom_call.1} parent=1 // pred_check
      _
    $region11: #{tpu_custom_call.1} parent=1 // pred_check_branch
      %25 = sbr.rel (0) target = $region13
    $region12: #{tpu_custom_call.1} parent=1 // pred_region
      _
    $region13: #{tpu_custom_call.1} parent=1 // pred_fallthru
      _
    // Predicated region
    $region14: #{tpu_custom_call.1} parent=1 // pred_check
      _
    $region15: #{tpu_custom_call.1} parent=1 // pred_check_branch
      %27 = sbr.rel (0) target = $region17
    $region16: #{tpu_custom_call.1} parent=1 // pred_region
      _
    $region17: #{tpu_custom_call.1} parent=1 // pred_fallthru
      _
    // Predicated region
    $region18: #{tpu_custom_call.1} parent=1 // pred_check
      _
    $region19: #{tpu_custom_call.1} parent=1 // pred_check_branch
      %29 = sbr.rel (0) target = $region21
    $region20: #{tpu_custom_call.1} parent=1 // pred_region
      _
    $region21: #{tpu_custom_call.1} parent=1 // pred_fallthru
      _
    %s30 = smul.u32 0, 32
    %s31 = sld [smem:[#allocation4 + %s30]]
    %s32 = scalar_lea.vmem %s1, %s31
    %v33 = vld [vmem:[%s32] sm:$0x1]
    %vm34 = vcmask 122880
    %35 = vst.msk [vmem:[#allocation2] sm:$0x1] %vm34, %v33
    %s36 = sadd.s32 %s30, 1
    %s37 = sld [smem:[#allocation4 + %s36]]
    %s38 = scalar_lea.vmem %s1, %s37
    %v39 = vld [vmem:[%s38] sm:$0x1]
    %41 = vrot.lane.b32.xlu0 %v39, 16
    %v42 = vpop.permute.xlu0 %41
    %vm44 = vcmask 254080
    %45 = vst.msk [vmem:[#allocation2] sm:$0x1] %vm44, %v42
    %s46 = sadd.s32 %s30, 2
    %s47 = sld [smem:[#allocation4 + %s46]]
    %s48 = scalar_lea.vmem %s1, %s47
    %v49 = vld [vmem:[%s48] sm:$0x1]
    %51 = vrot.lane.b32.xlu0 %v49, 32
    %v52 = vpop.permute.xlu0 %51
    %vm54 = vcmask 385280
    %55 = vst.msk [vmem:[#allocation2] sm:$0x1] %vm54, %v52
    %s56 = sadd.s32 %s30, 3
    %s57 = sld [smem:[#allocation4 + %s56]]
    %s58 = scalar_lea.vmem %s1, %s57
    %v59 = vld [vmem:[%s58] sm:$0x1]
    %61 = vrot.lane.b32.xlu0 %v59, 48
    %v62 = vpop.permute.xlu0 %61
    %vm64 = vcmask 516480
    %65 = vst.msk [vmem:[#allocation2] sm:$0x1] %vm64, %v62
    %s66 = sadd.s32 %s30, 4
    %s67 = sld [smem:[#allocation4 + %s66]]
    %s68 = scalar_lea.vmem %s1, %s67
    %v69 = vld [vmem:[%s68] sm:$0x1]
    %71 = vrot.lane.b32.xlu0 %v69, 64
    %v72 = vpop.permute.xlu0 %71
    %vm74 = vcmask 647680
    %75 = vst.msk [vmem:[#allocation2] sm:$0x1] %vm74, %v72
    %s76 = sadd.s32 %s30, 5
    %s77 = sld [smem:[#allocation4 + %s76]]
    %s78 = scalar_lea.vmem %s1, %s77
    %v79 = vld [vmem:[%s78] sm:$0x1]
    %81 = vrot.lane.b32.xlu0 %v79, 80
    %v82 = vpop.permute.xlu0 %81
    %vm84 = vcmask 778880
    %85 = vst.msk [vmem:[#allocation2] sm:$0x1] %vm84, %v82
    %s86 = sadd.s32 %s30, 6
    %s87 = sld [smem:[#allocation4 + %s86]]
    %s88 = scalar_lea.vmem %s1, %s87
    %v89 = vld [vmem:[%s88] sm:$0x1]
    %91 = vrot.lane.b32.xlu0 %v89, 96
    %v92 = vpop.permute.xlu0 %91
    %vm94 = vcmask 910080
    %95 = vst.msk [vmem:[#allocation2] sm:$0x1] %vm94, %v92
    %s96 = sadd.s32 %s30, 7
    %s97 = sld [smem:[#allocation4 + %s96]]
    %s98 = scalar_lea.vmem %s1, %s97
    %v99 = vld [vmem:[%s98] sm:$0x1]
    %101 = vrot.lane.b32.xlu0 %v99, 112
    %v102 = vpop.permute.xlu0 %101
    %vm104 = vcmask 1041280
    %105 = vst.msk [vmem:[#allocation2] sm:$0x1] %vm104, %v102
    %s106 = sadd.s32 %s30, 8
    %s107 = sld [smem:[#allocation4 + %s106]]
    %s108 = scalar_lea.vmem %s1, %s107
    %v109 = vld [vmem:[%s108] sm:$0x1]
    %110 = vst.msk [vmem:[#allocation2 + $0x1] sm:$0x1] %vm34, %v109
    %s111 = sadd.s32 %s30, 9
    %s112 = sld [smem:[#allocation4 + %s111]]
    %s113 = scalar_lea.vmem %s1, %s112
    %v114 = vld [vmem:[%s113] sm:$0x1]
    %116 = vrot.lane.b32.xlu0 %v114, 16
    %v117 = vpop.permute.xlu0 %116
    %119 = vst.msk [vmem:[#allocation2 + $0x1] sm:$0x1] %vm44, %v117
    %s120 = sadd.s32 %s30, 10
    %s121 = sld [smem:[#allocation4 + %s120]]
    %s122 = scalar_lea.vmem %s1, %s121
    %v123 = vld [vmem:[%s122] sm:$0x1]
    %125 = vrot.lane.b32.xlu0 %v123, 32
    %v126 = vpop.permute.xlu0 %125
    %128 = vst.msk [vmem:[#allocation2 + $0x1] sm:$0x1] %vm54, %v126
    %s129 = sadd.s32 %s30, 11
    %s130 = sld [smem:[#allocation4 + %s129]]
    %s131 = scalar_lea.vmem %s1, %s130
    %v132 = vld [vmem:[%s131] sm:$0x1]
    %134 = vrot.lane.b32.xlu0 %v132, 48
    %v135 = vpop.permute.xlu0 %134
    %137 = vst.msk [vmem:[#allocation2 + $0x1] sm:$0x1] %vm64, %v135
    %s138 = sadd.s32 %s30, 12
    %s139 = sld [smem:[#allocation4 + %s138]]
    %s140 = scalar_lea.vmem %s1, %s139
    %v141 = vld [vmem:[%s140] sm:$0x1]
    %143 = vrot.lane.b32.xlu0 %v141, 64
    %v144 = vpop.permute.xlu0 %143
    %146 = vst.msk [vmem:[#allocation2 + $0x1] sm:$0x1] %vm74, %v144
    %s147 = sadd.s32 %s30, 13
    %s148 = sld [smem:[#allocation4 + %s147]]
    %s149 = scalar_lea.vmem %s1, %s148
    %v150 = vld [vmem:[%s149] sm:$0x1]
    %152 = vrot.lane.b32.xlu0 %v150, 80
    %v153 = vpop.permute.xlu0 %152
    %155 = vst.msk [vmem:[#allocation2 + $0x1] sm:$0x1] %vm84, %v153
    %s156 = sadd.s32 %s30, 14
    %s157 = sld [smem:[#allocation4 + %s156]]
    %s158 = scalar_lea.vmem %s1, %s157
    %v159 = vld [vmem:[%s158] sm:$0x1]
    %161 = vrot.lane.b32.xlu0 %v159, 96
    %v162 = vpop.permute.xlu0 %161
    %164 = vst.msk [vmem:[#allocation2 + $0x1] sm:$0x1] %vm94, %v162
    %s165 = sadd.s32 %s30, 15
    %s166 = sld [smem:[#allocation4 + %s165]]
    %s167 = scalar_lea.vmem %s1, %s166
    %v168 = vld [vmem:[%s167] sm:$0x1]
    %170 = vrot.lane.b32.xlu0 %v168, 112
    %v171 = vpop.permute.xlu0 %170
    %173 = vst.msk [vmem:[#allocation2 + $0x1] sm:$0x1] %vm104, %v171
    %s174 = sadd.s32 %s30, 16
    %s175 = sld [smem:[#allocation4 + %s174]]
    %s176 = scalar_lea.vmem %s1, %s175
    %v177 = vld [vmem:[%s176] sm:$0x1]
    %178 = vst.msk [vmem:[#allocation2 + $0x2] sm:$0x1] %vm34, %v177
    %s179 = sadd.s32 %s30, 17
    %s180 = sld [smem:[#allocation4 + %s179]]
    %s181 = scalar_lea.vmem %s1, %s180
    %v182 = vld [vmem:[%s181] sm:$0x1]
    %184 = vrot.lane.b32.xlu0 %v182, 16
    %v185 = vpop.permute.xlu0 %184
    %187 = vst.msk [vmem:[#allocation2 + $0x2] sm:$0x1] %vm44, %v185
    %s188 = sadd.s32 %s30, 18
    %s189 = sld [smem:[#allocation4 + %s188]]
    %s190 = scalar_lea.vmem %s1, %s189
    %v191 = vld [vmem:[%s190] sm:$0x1]
    %193 = vrot.lane.b32.xlu0 %v191, 32
    %v194 = vpop.permute.xlu0 %193
    %196 = vst.msk [vmem:[#allocation2 + $0x2] sm:$0x1] %vm54, %v194
    %s197 = sadd.s32 %s30, 19
    %s198 = sld [smem:[#allocation4 + %s197]]
    %s199 = scalar_lea.vmem %s1, %s198
    %v200 = vld [vmem:[%s199] sm:$0x1]
    %202 = vrot.lane.b32.xlu0 %v200, 48
    %v203 = vpop.permute.xlu0 %202
    %205 = vst.msk [vmem:[#allocation2 + $0x2] sm:$0x1] %vm64, %v203
    %s206 = sadd.s32 %s30, 20
    %s207 = sld [smem:[#allocation4 + %s206]]
    %s208 = scalar_lea.vmem %s1, %s207
    %v209 = vld [vmem:[%s208] sm:$0x1]
    %211 = vrot.lane.b32.xlu0 %v209, 64
    %v212 = vpop.permute.xlu0 %211
    %214 = vst.msk [vmem:[#allocation2 + $0x2] sm:$0x1] %vm74, %v212
    %s215 = sadd.s32 %s30, 21
    %s216 = sld [smem:[#allocation4 + %s215]]
    %s217 = scalar_lea.vmem %s1, %s216
    %v218 = vld [vmem:[%s217] sm:$0x1]
    %220 = vrot.lane.b32.xlu0 %v218, 80
    %v221 = vpop.permute.xlu0 %220
    %223 = vst.msk [vmem:[#allocation2 + $0x2] sm:$0x1] %vm84, %v221
    %s224 = sadd.s32 %s30, 22
    %s225 = sld [smem:[#allocation4 + %s224]]
    %s226 = scalar_lea.vmem %s1, %s225
    %v227 = vld [vmem:[%s226] sm:$0x1]
    %229 = vrot.lane.b32.xlu0 %v227, 96
    %v230 = vpop.permute.xlu0 %229
    %232 = vst.msk [vmem:[#allocation2 + $0x2] sm:$0x1] %vm94, %v230
    %s233 = sadd.s32 %s30, 23
    %s234 = sld [smem:[#allocation4 + %s233]]
    %s235 = scalar_lea.vmem %s1, %s234
    %v236 = vld [vmem:[%s235] sm:$0x1]
    %238 = vrot.lane.b32.xlu0 %v236, 112
    %v239 = vpop.permute.xlu0 %238
    %241 = vst.msk [vmem:[#allocation2 + $0x2] sm:$0x1] %vm104, %v239
    %s242 = sadd.s32 %s30, 24
    %s243 = sld [smem:[#allocation4 + %s242]]
    %s244 = scalar_lea.vmem %s1, %s243
    %v245 = vld [vmem:[%s244] sm:$0x1]
    %246 = vst.msk [vmem:[#allocation2 + $0x3] sm:$0x1] %vm34, %v245
    %s247 = sadd.s32 %s30, 25
    %s248 = sld [smem:[#allocation4 + %s247]]
    %s249 = scalar_lea.vmem %s1, %s248
    %v250 = vld [vmem:[%s249] sm:$0x1]
    %252 = vrot.lane.b32.xlu0 %v250, 16
    %v253 = vpop.permute.xlu0 %252
    %255 = vst.msk [vmem:[#allocation2 + $0x3] sm:$0x1] %vm44, %v253
    %s256 = sadd.s32 %s30, 26
    %s257 = sld [smem:[#allocation4 + %s256]]
    %s258 = scalar_lea.vmem %s1, %s257
    %v259 = vld [vmem:[%s258] sm:$0x1]
    %261 = vrot.lane.b32.xlu0 %v259, 32
    %v262 = vpop.permute.xlu0 %261
    %264 = vst.msk [vmem:[#allocation2 + $0x3] sm:$0x1] %vm54, %v262
    %s265 = sadd.s32 %s30, 27
    %s266 = sld [smem:[#allocation4 + %s265]]
    %s267 = scalar_lea.vmem %s1, %s266
    %v268 = vld [vmem:[%s267] sm:$0x1]
    %270 = vrot.lane.b32.xlu0 %v268, 48
    %v271 = vpop.permute.xlu0 %270
    %273 = vst.msk [vmem:[#allocation2 + $0x3] sm:$0x1] %vm64, %v271
    %s274 = sadd.s32 %s30, 28
    %s275 = sld [smem:[#allocation4 + %s274]]
    %s276 = scalar_lea.vmem %s1, %s275
    %v277 = vld [vmem:[%s276] sm:$0x1]
    %279 = vrot.lane.b32.xlu0 %v277, 64
    %v280 = vpop.permute.xlu0 %279
    %282 = vst.msk [vmem:[#allocation2 + $0x3] sm:$0x1] %vm74, %v280
    %s283 = sadd.s32 %s30, 29
    %s284 = sld [smem:[#allocation4 + %s283]]
    %s285 = scalar_lea.vmem %s1, %s284
    %v286 = vld [vmem:[%s285] sm:$0x1]
    %288 = vrot.lane.b32.xlu0 %v286, 80
    %v289 = vpop.permute.xlu0 %288
    %291 = vst.msk [vmem:[#allocation2 + $0x3] sm:$0x1] %vm84, %v289
    %s292 = sadd.s32 %s30, 30
    %s293 = sld [smem:[#allocation4 + %s292]]
    %s294 = scalar_lea.vmem %s1, %s293
    %v295 = vld [vmem:[%s294] sm:$0x1]
    %297 = vrot.lane.b32.xlu0 %v295, 96
    %v298 = vpop.permute.xlu0 %297
    %300 = vst.msk [vmem:[#allocation2 + $0x3] sm:$0x1] %vm94, %v298
    %s301 = sadd.s32 %s30, 31
    %s302 = sld [smem:[#allocation4 + %s301]]
    %s303 = scalar_lea.vmem %s1, %s302
    %v304 = vld [vmem:[%s303] sm:$0x1]
    %306 = vrot.lane.b32.xlu0 %v304, 112
    %v307 = vpop.permute.xlu0 %306
    %309 = vst.msk [vmem:[#allocation2 + $0x3] sm:$0x1] %vm104, %v307
    %v310 = vld [vmem:[#allocation2] sm:$0xf]
    %v311 = vld [vmem:[%s2] sm:$0xff]
    %v312 = vld [vmem:[%s2 + $0x8] sm:$0xff]
    %v313 = vld [vmem:[%s2 + $0x10] sm:$0xff]
    %v314 = vld [vmem:[%s2 + $0x18] sm:$0xff]
    %v315 = vld [vmem:[%s2 + $0x20] sm:$0xff]
    %v316 = vld [vmem:[%s2 + $0x28] sm:$0xff]
    %v317 = vld [vmem:[%s2 + $0x30] sm:$0xff]
    %v318 = vld [vmem:[%s2 + $0x38] sm:$0xff]
    %v319 = vld [vmem:[%s2 + $0x40] sm:$0xff]
    %v320 = vld [vmem:[%s2 + $0x48] sm:$0xff]
    %v321 = vld [vmem:[%s2 + $0x50] sm:$0xff]
    %v322 = vld [vmem:[%s2 + $0x58] sm:$0xff]
    %v323 = vld [vmem:[%s2 + $0x60] sm:$0xff]
    %v324 = vld [vmem:[%s2 + $0x68] sm:$0xff]
    %v325 = vld [vmem:[%s2 + $0x70] sm:$0xff]
    %v326 = vld [vmem:[%s2 + $0x78] sm:$0xff]
    %v327 = vld [vmem:[%s3] sm:$0x1]
    %v329 = vlaneseq
    %v330 = vshrl.u32 %v329, 7
    %v331 = vsub.s32 0, %v330
    %v332 = vrot.slane %v327, %v331
    %334 = vmatprep.subr.mxu0 0.0
    %335 = vmatpush1.msra.mxu0 %v311
    %336 = vmatprep.subr.mxu0 0.0
    %337 = vmatpush1.msra.mxu0 %v312
    %338 = vmatprep.subr.mxu0 0.0
    %339 = vmatpush1.msra.mxu0 %v313
    %340 = vmatprep.subr.mxu0 0.0
    %341 = vmatpush1.msra.mxu0 %v314
    %342 = vmatprep.subr.mxu0 0.0
    %343 = vmatpush1.msra.mxu0 %v315
    %344 = vmatprep.subr.mxu0 0.0
    %345 = vmatpush1.msra.mxu0 %v316
    %346 = vmatprep.subr.mxu0 0.0
    %347 = vmatpush1.msra.mxu0 %v317
    %348 = vmatprep.subr.mxu0 0.0
    %349 = vmatpush1.msra.mxu0 %v318
    %350 = vmatprep.subr.mxu0 0.0
    %351 = vmatpush1.msra.mxu0 %v319
    %352 = vmatprep.subr.mxu0 0.0
    %353 = vmatpush1.msra.mxu0 %v320
    %354 = vmatprep.subr.mxu0 0.0
    %355 = vmatpush1.msra.mxu0 %v321
    %356 = vmatprep.subr.mxu0 0.0
    %357 = vmatpush1.msra.mxu0 %v322
    %358 = vmatprep.subr.mxu0 0.0
    %359 = vmatpush1.msra.mxu0 %v323
    %360 = vmatprep.subr.mxu0 0.0
    %361 = vmatpush1.msra.mxu0 %v324
    %362 = vmatprep.subr.mxu0 0.0
    %363 = vmatpush1.msra.mxu0 %v325
    %364 = vmatprep.subr.mxu0 0.0
    %365 = vmatpush1.msra.mxu0 %v326
    %366 = vmatprep.subr.mxu0 0.0
    %367 = vmatpush1.msra.mxu0 0.0
    %368 = vmatprep.subr.mxu0 0.0
    %369 = vmatpush1.msra.mxu0 0.0
    %370 = vmatprep.subr.mxu0 0.0
    %371 = vmatpush1.msra.mxu0 0.0
    %372 = vmatprep.subr.mxu0 0.0
    %373 = vmatpush1.msra.mxu0 0.0
    %374 = vmatprep.subr.mxu0 0.0
    %375 = vmatpush1.msra.mxu0 0.0
    %376 = vmatprep.subr.mxu0 0.0
    %377 = vmatpush1.msra.mxu0 0.0
    %378 = vmatprep.subr.mxu0 0.0
    %379 = vmatpush1.msra.mxu0 0.0
    %380 = vmatprep.subr.mxu0 0.0
    %381 = vmatpush1.msra.mxu0 0.0
    %382 = vmatprep.subr.mxu0 0.0
    %383 = vmatpush1.msra.mxu0 0.0
    %384 = vmatprep.subr.mxu0 0.0
    %385 = vmatpush1.msra.mxu0 0.0
    %386 = vmatprep.subr.mxu0 0.0
    %387 = vmatpush1.msra.mxu0 0.0
    %388 = vmatprep.subr.mxu0 0.0
    %389 = vmatpush1.msra.mxu0 0.0
    %390 = vmatprep.subr.mxu0 0.0
    %391 = vmatpush1.msra.mxu0 0.0
    %392 = vmatprep.subr.mxu0 0.0
    %393 = vmatpush1.msra.mxu0 0.0
    %394 = vmatprep.subr.mxu0 0.0
    %395 = vmatpush1.msra.mxu0 0.0
    %396 = vmatprep.subr.mxu0 0.0
    %397 = vmatpush1.msra.mxu0 0.0
    %398 = vmatprep.mubr.f32.mxu0 0.0
    %399 = vmatmul.mubr.f32.gmra.mrb[0].mxu0 %v310
    %v400 = vpop.f32.mrb[0].mxu0
    %v401 = vadd.f32 %v332, %v400
    %v402 = vpop.f32.mrb[0].mxu0
    %403 = vdwg.mxu0
    %v404 = vmax.f32 %v401, 0.0
    %v405 = vld [vmem:[%s4] sm:$0x1]
    %v406 = vld [vmem:[#allocation5] sm:$0x1]
    %408 = vset.pattern.permute.xlu0 0
    %409 = vperm.xlu0 %408, %v406
    %v410 = vpop.permute.xlu0 %409
    %v412 = vlaneseq
    %v413 = vshrl.u32 %v412, 7
    %v414 = vsub.s32 0, %v413
    %v415 = vrot.slane %v410, %v414
    %vm416 = vcmask 261120
    %v418 = vsel %vm416, %v405, 0
    %v421 = vsel %vm416, %v404, 0
    %423 = vmatprep.subr.mxu0 0.0
    %424 = vmatpush1.xpose.msra.mxu0 %v421
    %425 = vmatprep.subr.mxu0 0.0
    %426 = vmatpush1.xpose.msra.mxu0 0.0
    %427 = vmatprep.subr.mxu0 0.0
    %428 = vmatpush1.xpose.msra.mxu0 0.0
    %429 = vmatprep.subr.mxu0 0.0
    %430 = vmatpush1.xpose.msra.mxu0 0.0
    %431 = vmatprep.subr.mxu0 0.0
    %432 = vmatpush1.xpose.msra.mxu0 0.0
    %433 = vmatprep.subr.mxu0 0.0
    %434 = vmatpush1.xpose.msra.mxu0 0.0
    %435 = vmatprep.subr.mxu0 0.0
    %436 = vmatpush1.xpose.msra.mxu0 0.0
    %437 = vmatprep.subr.mxu0 0.0
    %438 = vmatpush1.xpose.msra.mxu0 0.0
    %439 = vmatprep.subr.mxu0 0.0
    %440 = vmatpush1.xpose.msra.mxu0 0.0
    %441 = vmatprep.subr.mxu0 0.0
    %442 = vmatpush1.xpose.msra.mxu0 0.0
    %443 = vmatprep.subr.mxu0 0.0
    %444 = vmatpush1.xpose.msra.mxu0 0.0
    %445 = vmatprep.subr.mxu0 0.0
    %446 = vmatpush1.xpose.msra.mxu0 0.0
    %447 = vmatprep.subr.mxu0 0.0
    %448 = vmatpush1.xpose.msra.mxu0 0.0
    %449 = vmatprep.subr.mxu0 0.0
    %450 = vmatpush1.xpose.msra.mxu0 0.0
    %451 = vmatprep.subr.mxu0 0.0
    %452 = vmatpush1.xpose.msra.mxu0 0.0
    %453 = vmatprep.subr.mxu0 0.0
    %454 = vmatpush1.xpose.msra.mxu0 0.0
    %455 = vmatprep.subr.mxu0 0.0
    %456 = vmatpush1.xpose.msra.mxu0 0.0
    %457 = vmatprep.subr.mxu0 0.0
    %458 = vmatpush1.xpose.msra.mxu0 0.0
    %459 = vmatprep.subr.mxu0 0.0
    %460 = vmatpush1.xpose.msra.mxu0 0.0
    %461 = vmatprep.subr.mxu0 0.0
    %462 = vmatpush1.xpose.msra.mxu0 0.0
    %463 = vmatprep.subr.mxu0 0.0
    %464 = vmatpush1.xpose.msra.mxu0 0.0
    %465 = vmatprep.subr.mxu0 0.0
    %466 = vmatpush1.xpose.msra.mxu0 0.0
    %467 = vmatprep.subr.mxu0 0.0
    %468 = vmatpush1.xpose.msra.mxu0 0.0
    %469 = vmatprep.subr.mxu0 0.0
    %470 = vmatpush1.xpose.msra.mxu0 0.0
    %471 = vmatprep.subr.mxu0 0.0
    %472 = vmatpush1.xpose.msra.mxu0 0.0
    %473 = vmatprep.subr.mxu0 0.0
    %474 = vmatpush1.xpose.msra.mxu0 0.0
    %475 = vmatprep.subr.mxu0 0.0
    %476 = vmatpush1.xpose.msra.mxu0 0.0
    %477 = vmatprep.subr.mxu0 0.0
    %478 = vmatpush1.xpose.msra.mxu0 0.0
    %479 = vmatprep.subr.mxu0 0.0
    %480 = vmatpush1.xpose.msra.mxu0 0.0
    %481 = vmatprep.subr.mxu0 0.0
    %482 = vmatpush1.xpose.msra.mxu0 0.0
    %483 = vmatprep.subr.mxu0 0.0
    %484 = vmatpush1.xpose.msra.mxu0 0.0
    %485 = vmatprep.subr.mxu0 0.0
    %486 = vmatpush1.xpose.msra.mxu0 0.0
    %487 = vmatprep.mubr.f32.mxu0 0.0
    %488 = vmatmul.mubr.f32.gmra.mrb[0].mxu0 %v418
    %v489 = vpop.f32.mrb[0].mxu0
    %v490 = vadd.f32 %v415, %v489
    %v491 = vpop.f32.mrb[0].mxu0
    %492 = vdwg.mxu0
    %vm493 = vcmask 24576
    %494 = vst.msk [vmem:[#allocation6] sm:$0x1] %vm493, %v490
    // Predicated region
    $region22: #{tpu_custom_call.1} parent=1 // pred_check
      _
    $region23: #{tpu_custom_call.1} parent=1 // pred_check_branch
      %496 = sbr.rel (0) target = $region25
    $region24: #{tpu_custom_call.1} parent=1 // pred_region
      %s498 = ssub.s32 16, 16
      %499 = vsyncadd [#allocation7], %s498
      %s501 = sshll.u32 [#allocation6], 4
      %s502 = int_to_ptr.vmem [resolvable:$true] %s501
      %504 = dma.vmem_to_hbm [thread:$0]  %s502, 16, %s6, [#allocation7]
    $region25: #{tpu_custom_call.1} parent=1 // pred_fallthru
      _
    // Predicated region
    $region26: #{tpu_custom_call.1} parent=1 // pred_check
      _
    $region27: #{tpu_custom_call.1} parent=1 // pred_check_branch
      %506 = sbr.rel (0) target = $region29
    $region28: #{tpu_custom_call.1} parent=1 // pred_region
      %507 = dma.done [#allocation7], 16
    $region29: #{tpu_custom_call.1} parent=1 // pred_fallthru
      _
    %508 = vsyncpa [#allocation7], 1

</llo_original>
